<compile_context>
chip_gen: v7x
topology: tpu7x:2x2x1
jax: 0.10.0
libtpu: 0.0.40
codegen_flags: <defaults>
</compile_context>

<pallas_src>
import jax
import jax.numpy as jnp
from jax.experimental import pallas as pl
from jax.experimental.pallas import tpu as pltpu


def _make_fused_mlp_kernel(n_layers):
    """Kernel applying n_layers of (x @ W + b), ReLU between layers.

    Ref order: x, (w_0, b_0), ..., (w_{n-1}, b_{n-1}), out.
    Activations/weights are bf16 (MXU-native); accumulation and bias add are
    f32; intermediates never touch HBM.
    """

    def kernel(*refs):
        x_ref = refs[0]
        o_ref = refs[-1]
        h = x_ref[...]  # bf16 batch tile
        for i in range(n_layers):
            w_ref = refs[1 + 2 * i]
            b_ref = refs[2 + 2 * i]
            # bf16 x bf16 -> f32 accumulate on the MXU.
            acc = jnp.dot(h, w_ref[...], preferred_element_type=jnp.float32)
            acc = acc + b_ref[...]  # f32 bias add
            if i < n_layers - 1:
                # ReLU, then back to bf16 for the next MXU pass.
                h = jnp.maximum(acc, 0.0).astype(jnp.bfloat16)
            else:
                h = acc
        o_ref[...] = h.astype(o_ref.dtype)

    return kernel


def fused_mlp(x, params, *, tm=64):
    """Single-launch fused MLP: y = L_{n-1}(relu(... relu(L_0(x)) ...)).

    x: (M, K0) f32; params: list of (w_i, b_i) with w_i:(K_i, N_i) f32,
    b_i:(1, N_i) f32.  Output is f32 (matching the PyTorch module's dtype).
    """
    n_layers = len(params)
    M, K0 = x.shape
    n_out = params[-1][0].shape[1]

    if M % tm != 0:
        tm = M  # fall back to a single batch tile
    grid = (M // tm,)

    # bf16 operands for the MXU; biases stay f32 (added to the f32 accumulator).
    x_bf = x.astype(jnp.bfloat16)

    flat_inputs = [x_bf]
    in_specs = [pl.BlockSpec((tm, K0), lambda i: (i, 0))]
    for w, b in params:
        flat_inputs.append(w.astype(jnp.bfloat16))
        # Weights/biases: same block every grid step -> stay VMEM-resident.
        in_specs.append(pl.BlockSpec(w.shape, lambda i: (0, 0)))
        flat_inputs.append(b)
        in_specs.append(pl.BlockSpec(b.shape, lambda i: (0, 0)))

    flops = 2 * sum(M * w.shape[0] * w.shape[1] for w, _ in params)
    bytes_accessed = (
        x_bf.size * 2
        + sum(w.size * 2 + b.size * 4 for w, b in params)
        + M * n_out * 4
    )

    return pl.pallas_call(
        _make_fused_mlp_kernel(n_layers),
        out_shape=jax.ShapeDtypeStruct((M, n_out), x.dtype),
        grid=grid,
        in_specs=in_specs,
        out_specs=pl.BlockSpec((tm, n_out), lambda i: (i, 0)),
        compiler_params=pltpu.CompilerParams(
            dimension_semantics=("parallel",)),
        cost_estimate=pl.CostEstimate(
            flops=flops, transcendentals=0, bytes_accessed=bytes_accessed),
    )(*flat_inputs)


def init_params(key, dims):
    """Deterministic PyTorch-Linear-style init: U(-1/sqrt(fan_in), 1/sqrt(fan_in))."""
    params = []
    for d_in, d_out in zip(dims[:-1], dims[1:]):
        key, kw, kb = jax.random.split(key, 3)
        bound = 1.0 / jnp.sqrt(jnp.float32(d_in))
        w = jax.random.uniform(kw, (d_in, d_out), jnp.float32, -bound, bound)
        b = jax.random.uniform(kb, (1, d_out), jnp.float32, -bound, bound)
        params.append((w, b))
    return params


@jax.jit
def model_forward(x, params):
    # Sequential application, mirroring `for m in self.model: x = m(x)`,
    # fused into one Pallas kernel.
    return fused_mlp(x, params)


if __name__ == "__main__":
    key = jax.random.PRNGKey(0)
    kx, kp = jax.random.split(key)

    # Input matching the example: x = torch.randn(128, 256)
    x = jax.random.normal(kx, (128, 256), jnp.float32)

    # Layer dims: 256 -> 256 -> 256 -> 128
    params = init_params(kp, (256, 256, 256, 128))

    out = model_forward(x, params)
    out = jax.block_until_ready(out)

    # Reference uses the SAME bf16-operand / f32-accumulate recipe
    # (the pure-f32 reference would differ by ~1e-3 rel due to bf16 inputs).
    ref = x.astype(jnp.bfloat16)
    for i, (w, b) in enumerate(params):
        ref = jnp.dot(ref, w.astype(jnp.bfloat16),
                      preferred_element_type=jnp.float32) + b
        if i < len(params) - 1:
            ref = jnp.maximum(ref, 0.0).astype(jnp.bfloat16)

    assert out.shape == (128, 128)
    assert jnp.allclose(out, ref, atol=2e-2, rtol=2e-2), float(
        jnp.max(jnp.abs(out - ref)))

    print("KERNEL_OK")
</pallas_src>

<mosaic_0001>
module attributes {stable_mosaic.version = 11 : i64} {
  func.func @kernel(%arg0: i32, %arg1: memref<64x256xbf16, #tpu.memory_space<vmem>>, %arg2: memref<256x256xbf16, #tpu.memory_space<vmem>>, %arg3: memref<1x256xf32, #tpu.memory_space<vmem>>, %arg4: memref<256x256xbf16, #tpu.memory_space<vmem>>, %arg5: memref<1x256xf32, #tpu.memory_space<vmem>>, %arg6: memref<256x128xbf16, #tpu.memory_space<vmem>>, %arg7: memref<1x128xf32, #tpu.memory_space<vmem>>, %arg8: memref<64x128xf32, #tpu.memory_space<vmem>>) attributes {dimension_semantics = [#tpu.dimension_semantics<parallel>], iteration_bounds = array<i64: 2>, scalar_prefetch = 0 : i64, scratch_operands = 0 : i64, tpu.core_type = #tpu.core_type<tc>, window_params = [{transform_indices = @transform_0, window_bounds = array<i64: 64, 256>}, {pipeline_mode = #tpu.pipeline_mode<synchronous>, transform_indices = @transform_1, window_bounds = array<i64: 256, 256>}, {pipeline_mode = #tpu.pipeline_mode<synchronous>, transform_indices = @transform_2, window_bounds = array<i64: 1, 256>}, {pipeline_mode = #tpu.pipeline_mode<synchronous>, transform_indices = @transform_3, window_bounds = array<i64: 256, 256>}, {pipeline_mode = #tpu.pipeline_mode<synchronous>, transform_indices = @transform_4, window_bounds = array<i64: 1, 256>}, {pipeline_mode = #tpu.pipeline_mode<synchronous>, transform_indices = @transform_5, window_bounds = array<i64: 256, 128>}, {pipeline_mode = #tpu.pipeline_mode<synchronous>, transform_indices = @transform_6, window_bounds = array<i64: 1, 128>}, {transform_indices = @transform_7, window_bounds = array<i64: 64, 128>}]} {
    %c0 = arith.constant 0 : index
    %c0_0 = arith.constant 0 : index
    %0 = vector.load %arg1[%c0, %c0_0] : memref<64x256xbf16, #tpu.memory_space<vmem>>, vector<64x256xbf16>
    %c0_1 = arith.constant 0 : index
    %c0_2 = arith.constant 0 : index
    %1 = vector.load %arg2[%c0_1, %c0_2] : memref<256x256xbf16, #tpu.memory_space<vmem>>, vector<256x256xbf16>
    %cst = arith.constant dense<0.000000e+00> : vector<64x256xf32>
    %2 = tpu.matmul %0, %1, %cst {dimension_numbers = #tpu.dot_dimension_numbers<[1], [0], [0], [1], [0, 0, 1, 1], [], []>} : vector<64x256xbf16>, vector<256x256xbf16>, vector<64x256xf32> -> vector<64x256xf32>
    %c0_3 = arith.constant 0 : index
    %c0_4 = arith.constant 0 : index
    %3 = vector.load %arg3[%c0_3, %c0_4] : memref<1x256xf32, #tpu.memory_space<vmem>>, vector<1x256xf32>
    %4 = vector.broadcast %3 : vector<1x256xf32> to vector<64x256xf32>
    %5 = arith.addf %2, %4 : vector<64x256xf32>
    %cst_5 = arith.constant 0.000000e+00 : f32
    %6 = vector.broadcast %cst_5 : f32 to vector<64x256xf32>
    %7 = arith.maximumf %5, %6 : vector<64x256xf32>
    %8 = arith.truncf %7 : vector<64x256xf32> to vector<64x256xbf16>
    %c0_6 = arith.constant 0 : index
    %c0_7 = arith.constant 0 : index
    %9 = vector.load %arg4[%c0_6, %c0_7] : memref<256x256xbf16, #tpu.memory_space<vmem>>, vector<256x256xbf16>
    %cst_8 = arith.constant dense<0.000000e+00> : vector<64x256xf32>
    %10 = tpu.matmul %8, %9, %cst_8 {dimension_numbers = #tpu.dot_dimension_numbers<[1], [0], [0], [1], [0, 0, 1, 1], [], []>} : vector<64x256xbf16>, vector<256x256xbf16>, vector<64x256xf32> -> vector<64x256xf32>
    %c0_9 = arith.constant 0 : index
    %c0_10 = arith.constant 0 : index
    %11 = vector.load %arg5[%c0_9, %c0_10] : memref<1x256xf32, #tpu.memory_space<vmem>>, vector<1x256xf32>
    %12 = vector.broadcast %11 : vector<1x256xf32> to vector<64x256xf32>
    %13 = arith.addf %10, %12 : vector<64x256xf32>
    %cst_11 = arith.constant 0.000000e+00 : f32
    %14 = vector.broadcast %cst_11 : f32 to vector<64x256xf32>
    %15 = arith.maximumf %13, %14 : vector<64x256xf32>
    %16 = arith.truncf %15 : vector<64x256xf32> to vector<64x256xbf16>
    %c0_12 = arith.constant 0 : index
    %c0_13 = arith.constant 0 : index
    %17 = vector.load %arg6[%c0_12, %c0_13] : memref<256x128xbf16, #tpu.memory_space<vmem>>, vector<256x128xbf16>
    %cst_14 = arith.constant dense<0.000000e+00> : vector<64x128xf32>
    %18 = tpu.matmul %16, %17, %cst_14 {dimension_numbers = #tpu.dot_dimension_numbers<[1], [0], [0], [1], [0, 0, 1, 1], [], []>} : vector<64x256xbf16>, vector<256x128xbf16>, vector<64x128xf32> -> vector<64x128xf32>
    %c0_15 = arith.constant 0 : index
    %c0_16 = arith.constant 0 : index
    %19 = vector.load %arg7[%c0_15, %c0_16] : memref<1x128xf32, #tpu.memory_space<vmem>>, vector<1x128xf32>
    %20 = vector.broadcast %19 : vector<1x128xf32> to vector<64x128xf32>
    %21 = arith.addf %18, %20 : vector<64x128xf32>
    %c0_17 = arith.constant 0 : index
    %c0_18 = arith.constant 0 : index
    %22 = vector.load %arg8[%c0_17, %c0_18] : memref<64x128xf32, #tpu.memory_space<vmem>>, vector<64x128xf32>
    tpu.vector_store %arg8[%c0_17, %c0_18], %21 {strides = array<i32>} : memref<64x128xf32, #tpu.memory_space<vmem>>, vector<64x128xf32>,
    return
  }
  func.func @transform_0(%arg0: i32) -> (i32, i32) {
    %c0_i32 = arith.constant 0 : i32
    %c0_i32_0 = arith.constant 0 : i32
    return %arg0, %c0_i32 : i32, i32
  }
  func.func @transform_1(%arg0: i32) -> (i32, i32) {
    %c0_i32 = arith.constant 0 : i32
    %c0_i32_0 = arith.constant 0 : i32
    %c0_i32_1 = arith.constant 0 : i32
    return %c0_i32, %c0_i32_0 : i32, i32
  }
  func.func @transform_2(%arg0: i32) -> (i32, i32) {
    %c0_i32 = arith.constant 0 : i32
    %c0_i32_0 = arith.constant 0 : i32
    %c0_i32_1 = arith.constant 0 : i32
    return %c0_i32, %c0_i32_0 : i32, i32
  }
  func.func @transform_3(%arg0: i32) -> (i32, i32) {
    %c0_i32 = arith.constant 0 : i32
    %c0_i32_0 = arith.constant 0 : i32
    %c0_i32_1 = arith.constant 0 : i32
    return %c0_i32, %c0_i32_0 : i32, i32
  }
  func.func @transform_4(%arg0: i32) -> (i32, i32) {
    %c0_i32 = arith.constant 0 : i32
    %c0_i32_0 = arith.constant 0 : i32
    %c0_i32_1 = arith.constant 0 : i32
    return %c0_i32, %c0_i32_0 : i32, i32
  }
  func.func @transform_5(%arg0: i32) -> (i32, i32) {
    %c0_i32 = arith.constant 0 : i32
    %c0_i32_0 = arith.constant 0 : i32
    %c0_i32_1 = arith.constant 0 : i32
    return %c0_i32, %c0_i32_0 : i32, i32
  }
  func.func @transform_6(%arg0: i32) -> (i32, i32) {
    %c0_i32 = arith.constant 0 : i32
    %c0_i32_0 = arith.constant 0 : i32
    %c0_i32_1 = arith.constant 0 : i32
    return %c0_i32, %c0_i32_0 : i32, i32
  }
  func.func @transform_7(%arg0: i32) -> (i32, i32) {
    %c0_i32 = arith.constant 0 : i32
    %c0_i32_0 = arith.constant 0 : i32
    return %arg0, %c0_i32 : i32, i32
  }
}

</mosaic_0001>

<llo_original>
// kernel: model_forward.1
$region0: #{model_forward.1}
  #allocation0 [shape = 'u32[]', space=smem, size = 0x4, offset = 0x4, fixed_abs, tag = 'smem constant byte address 0x4 - core index']
  #allocation1 [shape = 'u32[144,128]{1,0:T(1,128)}', space=vmem, size = 0x12000, scoped, tag = 'internal scratch']
  %s0 = inlined_call_operand.vmem [shape: bf16[128,256], index: 0, kind: input, shape index: {}]
  %s1 = inlined_call_operand.vmem [shape: bf16[256,256], index: 1, kind: input, shape index: {}]
  %s2 = inlined_call_operand.vmem [shape: f32[1,256], index: 2, kind: input, shape index: {}]
  %s3 = inlined_call_operand.vmem [shape: bf16[256,256], index: 3, kind: input, shape index: {}]
  %s4 = inlined_call_operand.vmem [shape: f32[1,256], index: 4, kind: input, shape index: {}]
  %s5 = inlined_call_operand.vmem [shape: bf16[256,128], index: 5, kind: input, shape index: {}]
  %s6 = inlined_call_operand.vmem [shape: f32[1,128], index: 6, kind: input, shape index: {}]
  %s7 = inlined_call_operand.hbm [shape: f32[128,128], index: 7, kind: output, shape index: {}]
  %s8 = sld [smem:[#allocation0]]
  $region61: #{model_forward.1} parent=0
    _
  %s10 = ssub.s32 1, %s8
  %s11 = scalar_select 0, %s10, %s8
  $region1: #{model_forward.1} parent=0
    #allocation2 [shape = 'u8[65536]{0}', space=vmem, size = 0x10000, scoped, tag = 'output window, operand 0']
    #allocation3 [shape = 's32[2]{0}', space=sflag, size = 0x8, scoped, tag = 'scoped memory for model_forward.1']
    %12 = vsyncpa [#allocation3], 0
    %s13 = scalar_lea.sflag [#allocation3], 1
    %14 = vsyncpa %s13, 0
    loop: start=0, step=1, limit=4
    $region2: #{model_forward.1} parent=1 // loop_pre_header
      _
    $region3: #{model_forward.1} parent=1 // loop_header
      %s16 = sphi 0, %s20
      %p17 = scmp.ge.s32.totalorder %s16, 4
      %s26 = sphi 0, %s28
      %s29 = sphi 0, %s26
      %s30 = sphi 0, %s29
      %s46 = sphi 0, %s30
      %s50 = sphi 0, %s50
      %s52 = sphi 0, %s50
      %s53 = sphi 0, %s52
      %s67 = sphi 0, %s53
      %s71 = sphi 0, %s71
      %s73 = sphi 0, %s71
      %s74 = sphi 0, %s73
      %s88 = sphi 0, %s74
      %s92 = sphi 0, %s92
      %s94 = sphi 0, %s92
      %s95 = sphi 0, %s94
      %s109 = sphi 0, %s95
      %s113 = sphi 0, %s113
      %s115 = sphi 0, %s113
      %s116 = sphi 0, %s115
      %s130 = sphi 0, %s116
      %s134 = sphi 0, %s134
      %s136 = sphi 0, %s134
      %s137 = sphi 0, %s136
      %s151 = sphi 0, %s137
      %s155 = sphi 0, %s155
      %s157 = sphi 0, %s155
      %s158 = sphi 0, %s157
      %s172 = sphi 0, %s158
      %s178 = sphi 0, %s180
      %s181 = sphi 0, %s178
      %s182 = sphi 0, %s181
      %s198 = sphi 0, %s182
    $region4: #{model_forward.1} parent=1 // loop_header_branch
      %19 = sbr.rel (%p17) target = $region8
    $region5: #{model_forward.1} parent=1 // loop_body
      %s21 = ssub.s32 %s16, 1
      %s22 = ssub.s32 %s16, 2
      %s23 = sadd.s32 %s16, 1
      %s24 = ssub.s32 %s16, %s23
      %p25 = scmp.eq.s32.totalorder %s24, 0
      %s27 = sadd.s32 %s26, 1
      %s28 = scalar_select %p25, %s26, %s27
      %p31 = pneg %p25
      %p32 = scmp.eq.s32.totalorder %s16, 1
      %p33 = por %p31, %p32
      %p34 = scmp.ne.s32.totalorder %s26, %s29
      %p35 = scmp.eq.s32.totalorder %s16, 0
      %p36 = por %p34, %p35
      %p37 = scmp.ne.s32.totalorder %s26, %s29
      %p38 = scmp.eq.s32.totalorder %s21, 1
      %p39 = por %p37, %p38
      %p40 = scmp.ne.s32.totalorder %s29, %s30
      %p41 = scmp.eq.s32.totalorder %s21, 0
      %p42 = por %p40, %p41
      %p43 = scmp.ne.s32.totalorder %s29, %s30
      %p44 = scmp.eq.s32.totalorder %s22, 1
      %p45 = por %p43, %p44
      %p47 = scmp.ne.s32.totalorder %s30, %s46
      %p48 = scmp.eq.s32.totalorder %s22, 0
      %p49 = por %p47, %p48
      %s51 = sadd.s32 %s50, 1
      %p54 = scmp.eq.s32.totalorder %s16, 1
      %p55 = scmp.ne.s32.totalorder %s50, %s52
      %p56 = scmp.eq.s32.totalorder %s16, 0
      %p57 = por %p55, %p56
      %p58 = scmp.ne.s32.totalorder %s50, %s52
      %p59 = scmp.eq.s32.totalorder %s21, 1
      %p60 = por %p58, %p59
      %p61 = scmp.ne.s32.totalorder %s52, %s53
      %p62 = scmp.eq.s32.totalorder %s21, 0
      %p63 = por %p61, %p62
      %p64 = scmp.ne.s32.totalorder %s52, %s53
      %p65 = scmp.eq.s32.totalorder %s22, 1
      %p66 = por %p64, %p65
      %p68 = scmp.ne.s32.totalorder %s53, %s67
      %p69 = scmp.eq.s32.totalorder %s22, 0
      %p70 = por %p68, %p69
      %s72 = sadd.s32 %s71, 1
      %p75 = scmp.eq.s32.totalorder %s16, 1
      %p76 = scmp.ne.s32.totalorder %s71, %s73
      %p77 = scmp.eq.s32.totalorder %s16, 0
      %p78 = por %p76, %p77
      %p79 = scmp.ne.s32.totalorder %s71, %s73
      %p80 = scmp.eq.s32.totalorder %s21, 1
      %p81 = por %p79, %p80
      %p82 = scmp.ne.s32.totalorder %s73, %s74
      %p83 = scmp.eq.s32.totalorder %s21, 0
      %p84 = por %p82, %p83
      %p85 = scmp.ne.s32.totalorder %s73, %s74
      %p86 = scmp.eq.s32.totalorder %s22, 1
      %p87 = por %p85, %p86
      %p89 = scmp.ne.s32.totalorder %s74, %s88
      %p90 = scmp.eq.s32.totalorder %s22, 0
      %p91 = por %p89, %p90
      %s93 = sadd.s32 %s92, 1
      %p96 = scmp.eq.s32.totalorder %s16, 1
      %p97 = scmp.ne.s32.totalorder %s92, %s94
      %p98 = scmp.eq.s32.totalorder %s16, 0
      %p99 = por %p97, %p98
      %p100 = scmp.ne.s32.totalorder %s92, %s94
      %p101 = scmp.eq.s32.totalorder %s21, 1
      %p102 = por %p100, %p101
      %p103 = scmp.ne.s32.totalorder %s94, %s95
      %p104 = scmp.eq.s32.totalorder %s21, 0
      %p105 = por %p103, %p104
      %p106 = scmp.ne.s32.totalorder %s94, %s95
      %p107 = scmp.eq.s32.totalorder %s22, 1
      %p108 = por %p106, %p107
      %p110 = scmp.ne.s32.totalorder %s95, %s109
      %p111 = scmp.eq.s32.totalorder %s22, 0
      %p112 = por %p110, %p111
      %s114 = sadd.s32 %s113, 1
      %p117 = scmp.eq.s32.totalorder %s16, 1
      %p118 = scmp.ne.s32.totalorder %s113, %s115
      %p119 = scmp.eq.s32.totalorder %s16, 0
      %p120 = por %p118, %p119
      %p121 = scmp.ne.s32.totalorder %s113, %s115
      %p122 = scmp.eq.s32.totalorder %s21, 1
      %p123 = por %p121, %p122
      %p124 = scmp.ne.s32.totalorder %s115, %s116
      %p125 = scmp.eq.s32.totalorder %s21, 0
      %p126 = por %p124, %p125
      %p127 = scmp.ne.s32.totalorder %s115, %s116
      %p128 = scmp.eq.s32.totalorder %s22, 1
      %p129 = por %p127, %p128
      %p131 = scmp.ne.s32.totalorder %s116, %s130
      %p132 = scmp.eq.s32.totalorder %s22, 0
      %p133 = por %p131, %p132
      %s135 = sadd.s32 %s134, 1
      %p138 = scmp.eq.s32.totalorder %s16, 1
      %p139 = scmp.ne.s32.totalorder %s134, %s136
      %p140 = scmp.eq.s32.totalorder %s16, 0
      %p141 = por %p139, %p140
      %p142 = scmp.ne.s32.totalorder %s134, %s136
      %p143 = scmp.eq.s32.totalorder %s21, 1
      %p144 = por %p142, %p143
      %p145 = scmp.ne.s32.totalorder %s136, %s137
      %p146 = scmp.eq.s32.totalorder %s21, 0
      %p147 = por %p145, %p146
      %p148 = scmp.ne.s32.totalorder %s136, %s137
      %p149 = scmp.eq.s32.totalorder %s22, 1
      %p150 = por %p148, %p149
      %p152 = scmp.ne.s32.totalorder %s137, %s151
      %p153 = scmp.eq.s32.totalorder %s22, 0
      %p154 = por %p152, %p153
      %s156 = sadd.s32 %s155, 1
      %p159 = scmp.eq.s32.totalorder %s16, 1
      %p160 = scmp.ne.s32.totalorder %s155, %s157
      %p161 = scmp.eq.s32.totalorder %s16, 0
      %p162 = por %p160, %p161
      %p163 = scmp.ne.s32.totalorder %s155, %s157
      %p164 = scmp.eq.s32.totalorder %s21, 1
      %p165 = por %p163, %p164
      %p166 = scmp.ne.s32.totalorder %s157, %s158
      %p167 = scmp.eq.s32.totalorder %s21, 0
      %p168 = por %p166, %p167
      %p169 = scmp.ne.s32.totalorder %s157, %s158
      %p170 = scmp.eq.s32.totalorder %s22, 1
      %p171 = por %p169, %p170
      %p173 = scmp.ne.s32.totalorder %s158, %s172
      %p174 = scmp.eq.s32.totalorder %s22, 0
      %p175 = por %p173, %p174
      %s176 = ssub.s32 %s16, %s23
      %p177 = scmp.eq.s32.totalorder %s176, 0
      %s179 = sadd.s32 %s178, 1
      %s180 = scalar_select %p177, %s178, %s179
      %p183 = pneg %p177
      %p184 = scmp.eq.s32.totalorder %s16, 1
      %p185 = por %p183, %p184
      %p186 = scmp.ne.s32.totalorder %s178, %s181
      %p187 = scmp.eq.s32.totalorder %s16, 0
      %p188 = por %p186, %p187
      %p189 = scmp.ne.s32.totalorder %s178, %s181
      %p190 = scmp.eq.s32.totalorder %s21, 1
      %p191 = por %p189, %p190
      %p192 = scmp.ne.s32.totalorder %s181, %s182
      %p193 = scmp.eq.s32.totalorder %s21, 0
      %p194 = por %p192, %p193
      %p195 = scmp.ne.s32.totalorder %s181, %s182
      %p196 = scmp.eq.s32.totalorder %s22, 1
      %p197 = por %p195, %p196
      %p199 = scmp.ne.s32.totalorder %s182, %s198
      %p200 = scmp.eq.s32.totalorder %s22, 0
      %p201 = por %p199, %p200
      %p202 = scmp.le.s32.totalorder 1, %s16
      %p203 = scmp.lt.s32.totalorder %s16, 3
      %p204 = pnand %p202, %p203
      %p205 = pneg %p204
      // Predicated region
      $region9: #{model_forward.1} parent=5 // pred_check
        _
      $region10: #{model_forward.1} parent=5 // pred_check_branch
        %207 = sbr.rel (%p204) target = $region12
      $region11: #{model_forward.1} parent=5 // pred_region
        %s208 = ssub.s32 %s16, 1
        // Predicated region
        $region13: #{model_forward.1} parent=11 // pred_check
          %p209 = pneg %p63
        $region14: #{model_forward.1} parent=11 // pred_check_branch
          %211 = sbr.rel (%p209) target = $region16
        $region15: #{model_forward.1} parent=11 // pred_region
          _
        $region16: #{model_forward.1} parent=11 // pred_fallthru
          _
        // Predicated region
        $region17: #{model_forward.1} parent=11 // pred_check
          %p212 = pneg %p84
        $region18: #{model_forward.1} parent=11 // pred_check_branch
          %214 = sbr.rel (%p212) target = $region20
        $region19: #{model_forward.1} parent=11 // pred_region
          _
        $region20: #{model_forward.1} parent=11 // pred_fallthru
          _
        // Predicated region
        $region21: #{model_forward.1} parent=11 // pred_check
          %p215 = pneg %p105
        $region22: #{model_forward.1} parent=11 // pred_check_branch
          %217 = sbr.rel (%p215) target = $region24
        $region23: #{model_forward.1} parent=11 // pred_region
          _
        $region24: #{model_forward.1} parent=11 // pred_fallthru
          _
        // Predicated region
        $region25: #{model_forward.1} parent=11 // pred_check
          %p218 = pneg %p126
        $region26: #{model_forward.1} parent=11 // pred_check_branch
          %220 = sbr.rel (%p218) target = $region28
        $region27: #{model_forward.1} parent=11 // pred_region
          _
        $region28: #{model_forward.1} parent=11 // pred_fallthru
          _
        // Predicated region
        $region29: #{model_forward.1} parent=11 // pred_check
          %p221 = pneg %p147
        $region30: #{model_forward.1} parent=11 // pred_check_branch
          %223 = sbr.rel (%p221) target = $region32
        $region31: #{model_forward.1} parent=11 // pred_region
          _
        $region32: #{model_forward.1} parent=11 // pred_fallthru
          _
        // Predicated region
        $region33: #{model_forward.1} parent=11 // pred_check
          %p224 = pneg %p168
        $region34: #{model_forward.1} parent=11 // pred_check_branch
          %226 = sbr.rel (%p224) target = $region36
        $region35: #{model_forward.1} parent=11 // pred_region
          _
        $region36: #{model_forward.1} parent=11 // pred_fallthru
          _
      $region12: #{model_forward.1} parent=5 // pred_fallthru
        _
      %p227 = scmp.lt.s32.totalorder %s16, 2
      // Predicated region
      $region37: #{model_forward.1} parent=5 // pred_check
        %p228 = pneg %p227
      $region38: #{model_forward.1} parent=5 // pred_check_branch
        %230 = sbr.rel (%p228) target = $region40
      $region39: #{model_forward.1} parent=5 // pred_region
        // Predicated region
        $region41: #{model_forward.1} parent=39 // pred_check
          %p231 = pneg %p36
        $region42: #{model_forward.1} parent=39 // pred_check_branch
          %233 = sbr.rel (%p231) target = $region44
        $region43: #{model_forward.1} parent=39 // pred_region
          %s234 = smul.u32 8, %s16
          %p235 = scmp.lt.s32.totalorder %s234, 15
          %s236 = scalar_select %p235, %s234, 15
          %s237 = smul.addr %s236, 2
          %s238 = smul.addr %s237, 4
          %s239 = scalar_lea.vmem %s0, %s238
          %s240 = smul.u32 8, %s16
        $region44: #{model_forward.1} parent=39 // pred_fallthru
          _
      $region40: #{model_forward.1} parent=5 // pred_fallthru
        _
      %p241 = scmp.le.s32.totalorder 1, %s16
      %p242 = scmp.lt.s32.totalorder %s16, 3
      %p243 = pnand %p241, %p242
      %p244 = pneg %p243
      // Predicated region
      $region45: #{model_forward.1} parent=5 // pred_check
        _
      $region46: #{model_forward.1} parent=5 // pred_check_branch
        %246 = sbr.rel (%p243) target = $region48
      $region47: #{model_forward.1} parent=5 // pred_region
        %s247 = ssub.s32 %s16, 1
        %s248 = smul.u32 8, %s21
        %p249 = scmp.lt.s32.totalorder %s248, 15
        %s250 = scalar_select %p249, %s248, 15
        %s251 = smul.addr %s250, 2
        %s252 = smul.addr %s251, 4
        %s253 = scalar_lea.vmem %s0, %s252
        %p254 = pneg %p42
        %p255 = pneg %p39
        %p256 = pneg %p63
        %p257 = pneg %p60
        %p258 = pneg %p84
        %p259 = pneg %p81
        %p260 = pneg %p105
        %p261 = pneg %p102
        %p262 = pneg %p126
        %p263 = pneg %p123
        %p264 = pneg %p147
        %p265 = pneg %p144
        %p266 = pneg %p168
        %p267 = pneg %p165
        %p268 = pneg %p194
        %p269 = pneg %p191
        %s270 = sand.u32 %s181, 1
        %s271 = scalar_lea.sflag [#allocation3], %s270
        %s272 = sand.u32 %s181, 1
        %s273 = smul.addr %s272, 64
        %s274 = scalar_lea.vmem [#allocation2], %s273
        %s275 = smul.u32 8, %s21
        %p276 = scmp.lt.s32.totalorder %s275, 15
        %s277 = scalar_select %p276, %s275, 15
        %s278 = smul.addr %s277, 2
        %s279 = smul.addr %s278, 4
        %s280 = scalar_lea.vmem %s0, %s279
        %s281 = smul.u32 8, %s21
        %s282 = smul.u32 8, %s21
        %v284 = vld [vmem:[%s280] sm:$0xff]
        %v285 = vld [vmem:[%s280 + $0x8] sm:$0xff]
        %v286 = vld [vmem:[%s280 + $0x10] sm:$0xff]
        %v287 = vld [vmem:[%s280 + $0x18] sm:$0xff]
        %v288 = vld [vmem:[%s280 + $0x20] sm:$0xff]
        %v289 = vld [vmem:[%s280 + $0x28] sm:$0xff]
        %v290 = vld [vmem:[%s280 + $0x30] sm:$0xff]
        %v291 = vld [vmem:[%s280 + $0x38] sm:$0xff]
        %v292 = vld [vmem:[%s1] sm:$0xff]
        %v293 = vld [vmem:[%s1 + $0x8] sm:$0xff]
        %v294 = vld [vmem:[%s1 + $0x10] sm:$0xff]
        %v295 = vld [vmem:[%s1 + $0x18] sm:$0xff]
        %v296 = vld [vmem:[%s1 + $0x20] sm:$0xff]
        %v297 = vld [vmem:[%s1 + $0x28] sm:$0xff]
        %v298 = vld [vmem:[%s1 + $0x30] sm:$0xff]
        %v299 = vld [vmem:[%s1 + $0x38] sm:$0xff]
        %v300 = vld [vmem:[%s1 + $0x40] sm:$0xff]
        %v301 = vld [vmem:[%s1 + $0x48] sm:$0xff]
        %v302 = vld [vmem:[%s1 + $0x50] sm:$0xff]
        %v303 = vld [vmem:[%s1 + $0x58] sm:$0xff]
        %v304 = vld [vmem:[%s1 + $0x60] sm:$0xff]
        %v305 = vld [vmem:[%s1 + $0x68] sm:$0xff]
        %v306 = vld [vmem:[%s1 + $0x70] sm:$0xff]
        %v307 = vld [vmem:[%s1 + $0x78] sm:$0xff]
        %v308 = vld [vmem:[%s1 + $0x80] sm:$0xff]
        %v309 = vld [vmem:[%s1 + $0x88] sm:$0xff]
        %v310 = vld [vmem:[%s1 + $0x90] sm:$0xff]
        %v311 = vld [vmem:[%s1 + $0x98] sm:$0xff]
        %v312 = vld [vmem:[%s1 + $0xa0] sm:$0xff]
        %v313 = vld [vmem:[%s1 + $0xa8] sm:$0xff]
        %v314 = vld [vmem:[%s1 + $0xb0] sm:$0xff]
        %v315 = vld [vmem:[%s1 + $0xb8] sm:$0xff]
        %v316 = vld [vmem:[%s1 + $0xc0] sm:$0xff]
        %v317 = vld [vmem:[%s1 + $0xc8] sm:$0xff]
        %v318 = vld [vmem:[%s1 + $0xd0] sm:$0xff]
        %v319 = vld [vmem:[%s1 + $0xd8] sm:$0xff]
        %v320 = vld [vmem:[%s1 + $0xe0] sm:$0xff]
        %v321 = vld [vmem:[%s1 + $0xe8] sm:$0xff]
        %v322 = vld [vmem:[%s1 + $0xf0] sm:$0xff]
        %v323 = vld [vmem:[%s1 + $0xf8] sm:$0xff]
        %v324 = vld [vmem:[%s2] sm:$0x3]
        %v326 = vlaneseq
        %v327 = vshrl.u32 %v326, 7
        %v328 = vsub.s32 0, %v327
        %v329 = vrot.slane %v324, %v328
        %v330 = vlaneseq
        %v331 = vshrl.u32 %v330, 7
        %v332 = vsub.s32 1, %v331
        %v333 = vrot.slane %v324, %v332
        %v344 = vunpack.c.l.b16 %v284
        %v345 = vunpack.c.h.b16 %v284
        %v346 = vunpack.c.l.b16 %v285
        %v347 = vunpack.c.h.b16 %v285
        %v348 = vunpack.c.l.b16 %v286
        %v349 = vunpack.c.h.b16 %v286
        %v350 = vunpack.c.l.b16 %v287
        %v351 = vunpack.c.h.b16 %v287
        %v352 = vunpack.c.l.b16 %v288
        %v353 = vunpack.c.h.b16 %v288
        %v354 = vunpack.c.l.b16 %v289
        %v355 = vunpack.c.h.b16 %v289
        %v356 = vunpack.c.l.b16 %v290
        %v357 = vunpack.c.h.b16 %v290
        %v358 = vunpack.c.l.b16 %v291
        %v359 = vunpack.c.h.b16 %v291
        %v360 = vpack.c.b16 %v346, %v344
        %v361 = vpack.c.b16 %v347, %v345
        %v362 = vpack.c.b16 %v350, %v348
        %v363 = vpack.c.b16 %v351, %v349
        %v364 = vpack.c.b16 %v354, %v352
        %v365 = vpack.c.b16 %v355, %v353
        %v366 = vpack.c.b16 %v358, %v356
        %v367 = vpack.c.b16 %v359, %v357
        %v408 = vunpack.c.l.b16 %v292
        %v409 = vunpack.c.h.b16 %v292
        %v410 = vunpack.c.l.b16 %v293
        %v411 = vunpack.c.h.b16 %v293
        %v412 = vunpack.c.l.b16 %v294
        %v413 = vunpack.c.h.b16 %v294
        %v414 = vunpack.c.l.b16 %v295
        %v415 = vunpack.c.h.b16 %v295
        %v416 = vunpack.c.l.b16 %v296
        %v417 = vunpack.c.h.b16 %v296
        %v418 = vunpack.c.l.b16 %v297
        %v419 = vunpack.c.h.b16 %v297
        %v420 = vunpack.c.l.b16 %v298
        %v421 = vunpack.c.h.b16 %v298
        %v422 = vunpack.c.l.b16 %v299
        %v423 = vunpack.c.h.b16 %v299
        %v424 = vunpack.c.l.b16 %v300
        %v425 = vunpack.c.h.b16 %v300
        %v426 = vunpack.c.l.b16 %v301
        %v427 = vunpack.c.h.b16 %v301
        %v428 = vunpack.c.l.b16 %v302
        %v429 = vunpack.c.h.b16 %v302
        %v430 = vunpack.c.l.b16 %v303
        %v431 = vunpack.c.h.b16 %v303
        %v432 = vunpack.c.l.b16 %v304
        %v433 = vunpack.c.h.b16 %v304
        %v434 = vunpack.c.l.b16 %v305
        %v435 = vunpack.c.h.b16 %v305
        %v436 = vunpack.c.l.b16 %v306
        %v437 = vunpack.c.h.b16 %v306
        %v438 = vunpack.c.l.b16 %v307
        %v439 = vunpack.c.h.b16 %v307
        %v440 = vunpack.c.l.b16 %v308
        %v441 = vunpack.c.h.b16 %v308
        %v442 = vunpack.c.l.b16 %v309
        %v443 = vunpack.c.h.b16 %v309
        %v444 = vunpack.c.l.b16 %v310
        %v445 = vunpack.c.h.b16 %v310
        %v446 = vunpack.c.l.b16 %v311
        %v447 = vunpack.c.h.b16 %v311
        %v448 = vunpack.c.l.b16 %v312
        %v449 = vunpack.c.h.b16 %v312
        %v450 = vunpack.c.l.b16 %v313
        %v451 = vunpack.c.h.b16 %v313
        %v452 = vunpack.c.l.b16 %v314
        %v453 = vunpack.c.h.b16 %v314
        %v454 = vunpack.c.l.b16 %v315
        %v455 = vunpack.c.h.b16 %v315
        %v456 = vunpack.c.l.b16 %v316
        %v457 = vunpack.c.h.b16 %v316
        %v458 = vunpack.c.l.b16 %v317
        %v459 = vunpack.c.h.b16 %v317
        %v460 = vunpack.c.l.b16 %v318
        %v461 = vunpack.c.h.b16 %v318
        %v462 = vunpack.c.l.b16 %v319
        %v463 = vunpack.c.h.b16 %v319
        %v464 = vunpack.c.l.b16 %v320
        %v465 = vunpack.c.h.b16 %v320
        %v466 = vunpack.c.l.b16 %v321
        %v467 = vunpack.c.h.b16 %v321
        %v468 = vunpack.c.l.b16 %v322
        %v469 = vunpack.c.h.b16 %v322
        %v470 = vunpack.c.l.b16 %v323
        %v471 = vunpack.c.h.b16 %v323
        %v472 = vpack.c.b16 %v410, %v408
        %v473 = vpack.c.b16 %v411, %v409
        %v474 = vpack.c.b16 %v414, %v412
        %v475 = vpack.c.b16 %v415, %v413
        %v476 = vpack.c.b16 %v418, %v416
        %v477 = vpack.c.b16 %v419, %v417
        %v478 = vpack.c.b16 %v422, %v420
        %v479 = vpack.c.b16 %v423, %v421
        %v480 = vpack.c.b16 %v426, %v424
        %v481 = vpack.c.b16 %v427, %v425
        %v482 = vpack.c.b16 %v430, %v428
        %v483 = vpack.c.b16 %v431, %v429
        %v484 = vpack.c.b16 %v434, %v432
        %v485 = vpack.c.b16 %v435, %v433
        %v486 = vpack.c.b16 %v438, %v436
        %v487 = vpack.c.b16 %v439, %v437
        %v488 = vpack.c.b16 %v442, %v440
        %v489 = vpack.c.b16 %v443, %v441
        %v490 = vpack.c.b16 %v446, %v444
        %v491 = vpack.c.b16 %v447, %v445
        %v492 = vpack.c.b16 %v450, %v448
        %v493 = vpack.c.b16 %v451, %v449
        %v494 = vpack.c.b16 %v454, %v452
        %v495 = vpack.c.b16 %v455, %v453
        %v496 = vpack.c.b16 %v458, %v456
        %v497 = vpack.c.b16 %v459, %v457
        %v498 = vpack.c.b16 %v462, %v460
        %v499 = vpack.c.b16 %v463, %v461
        %v500 = vpack.c.b16 %v466, %v464
        %v501 = vpack.c.b16 %v467, %v465
        %v502 = vpack.c.b16 %v470, %v468
        %v503 = vpack.c.b16 %v471, %v469
        %536 = vmatprep.subr.bf16.mxu0 %v473
        %537 = vmatpush1.bf16.msra.mxu0 %v472
        %538 = vmatprep.subr.bf16.mxu0 %v475
        %539 = vmatpush1.bf16.msra.mxu0 %v474
        %540 = vmatprep.subr.bf16.mxu0 %v477
        %541 = vmatpush1.bf16.msra.mxu0 %v476
        %542 = vmatprep.subr.bf16.mxu0 %v479
        %543 = vmatpush1.bf16.msra.mxu0 %v478
        %544 = vmatprep.subr.bf16.mxu0 %v481
        %545 = vmatpush1.bf16.msra.mxu0 %v480
        %546 = vmatprep.subr.bf16.mxu0 %v483
        %547 = vmatpush1.bf16.msra.mxu0 %v482
        %548 = vmatprep.subr.bf16.mxu0 %v485
        %549 = vmatpush1.bf16.msra.mxu0 %v484
        %550 = vmatprep.subr.bf16.mxu0 %v487
        %551 = vmatpush1.bf16.msra.mxu0 %v486
        %552 = vmatprep.subr.bf16.mxu0 %v489
        %553 = vmatpush1.bf16.msra.mxu0 %v488
        %554 = vmatprep.subr.bf16.mxu0 %v491
        %555 = vmatpush1.bf16.msra.mxu0 %v490
        %556 = vmatprep.subr.bf16.mxu0 %v493
        %557 = vmatpush1.bf16.msra.mxu0 %v492
        %558 = vmatprep.subr.bf16.mxu0 %v495
        %559 = vmatpush1.bf16.msra.mxu0 %v494
        %560 = vmatprep.subr.bf16.mxu0 %v497
        %561 = vmatpush1.bf16.msra.mxu0 %v496
        %562 = vmatprep.subr.bf16.mxu0 %v499
        %563 = vmatpush1.bf16.msra.mxu0 %v498
        %564 = vmatprep.subr.bf16.mxu0 %v501
        %565 = vmatpush1.bf16.msra.mxu0 %v500
        %566 = vmatprep.subr.bf16.mxu0 %v503
        %567 = vmatpush1.bf16.msra.mxu0 %v502
        %568 = vmatprep.mubr.bf16.mxu0 %v361
        %569 = vmatmul.mubr.bf16.gmra.mrb[0].mxu0 %v360
        %v570 = vpop.f32.mrb[0].mxu0
        %v571 = vadd.f32 %v329, %v570
        %v572 = vpop.f32.mrb[0].mxu0
        %v573 = vadd.f32 %v333, %v572
        %v574 = vpop.f32.mrb[0].mxu0
        %v575 = vadd.f32 %v329, %v574
        %v576 = vpop.f32.mrb[0].mxu0
        %v577 = vadd.f32 %v333, %v576
        %578 = vmatprep.mubr.bf16.mxu0 %v363
        %579 = vmatmul.mubr.bf16.gmra.mrb[0].mxu0 %v362
        %v580 = vpop.f32.mrb[0].mxu0
        %v581 = vadd.f32 %v329, %v580
        %v582 = vpop.f32.mrb[0].mxu0
        %v583 = vadd.f32 %v333, %v582
        %v584 = vpop.f32.mrb[0].mxu0
        %v585 = vadd.f32 %v329, %v584
        %v586 = vpop.f32.mrb[0].mxu0
        %v587 = vadd.f32 %v333, %v586
        %588 = vmatprep.mubr.bf16.mxu0 %v365
        %589 = vmatmul.mubr.bf16.gmra.mrb[0].mxu0 %v364
        %v590 = vpop.f32.mrb[0].mxu0
        %v591 = vadd.f32 %v329, %v590
        %v592 = vpop.f32.mrb[0].mxu0
        %v593 = vadd.f32 %v333, %v592
        %v594 = vpop.f32.mrb[0].mxu0
        %v595 = vadd.f32 %v329, %v594
        %v596 = vpop.f32.mrb[0].mxu0
        %v597 = vadd.f32 %v333, %v596
        %598 = vmatprep.mubr.bf16.mxu0 %v367
        %599 = vmatmul.mubr.bf16.gmra.mrb[0].mxu0 %v366
        %v600 = vpop.f32.mrb[0].mxu0
        %v601 = vadd.f32 %v329, %v600
        %v602 = vpop.f32.mrb[0].mxu0
        %v603 = vadd.f32 %v333, %v602
        %v604 = vpop.f32.mrb[0].mxu0
        %v605 = vadd.f32 %v329, %v604
        %v606 = vpop.f32.mrb[0].mxu0
        %v607 = vadd.f32 %v333, %v606
        %608 = vdwg.mxu0
        %v609 = vmax.f32 %v571, 0.0
        %v610 = vmax.f32 %v573, 0.0
        %v611 = vmax.f32 %v575, 0.0
        %v612 = vmax.f32 %v577, 0.0
        %v613 = vmax.f32 %v581, 0.0
        %v614 = vmax.f32 %v583, 0.0
        %v615 = vmax.f32 %v585, 0.0
        %v616 = vmax.f32 %v587, 0.0
        %v617 = vmax.f32 %v591, 0.0
        %v618 = vmax.f32 %v593, 0.0
        %v619 = vmax.f32 %v595, 0.0
        %v620 = vmax.f32 %v597, 0.0
        %v621 = vmax.f32 %v601, 0.0
        %v622 = vmax.f32 %v603, 0.0
        %v623 = vmax.f32 %v605, 0.0
        %v624 = vmax.f32 %v607, 0.0
        %v625 = vpack.c.bf16 %v611, %v609
        %v626 = vpack.c.bf16 %v612, %v610
        %v627 = vpack.c.bf16 %v615, %v613
        %v628 = vpack.c.bf16 %v616, %v614
        %v629 = vpack.c.bf16 %v619, %v617
        %v630 = vpack.c.bf16 %v620, %v618
        %v631 = vpack.c.bf16 %v623, %v621
        %v632 = vpack.c.bf16 %v624, %v622
        %v633 = vld [vmem:[%s3] sm:$0xff]
        %v634 = vld [vmem:[%s3 + $0x8] sm:$0xff]
        %v635 = vld [vmem:[%s3 + $0x10] sm:$0xff]
        %v636 = vld [vmem:[%s3 + $0x18] sm:$0xff]
        %v637 = vld [vmem:[%s3 + $0x20] sm:$0xff]
        %v638 = vld [vmem:[%s3 + $0x28] sm:$0xff]
        %v639 = vld [vmem:[%s3 + $0x30] sm:$0xff]
        %v640 = vld [vmem:[%s3 + $0x38] sm:$0xff]
        %v641 = vld [vmem:[%s3 + $0x40] sm:$0xff]
        %v642 = vld [vmem:[%s3 + $0x48] sm:$0xff]
        %v643 = vld [vmem:[%s3 + $0x50] sm:$0xff]
        %v644 = vld [vmem:[%s3 + $0x58] sm:$0xff]
        %v645 = vld [vmem:[%s3 + $0x60] sm:$0xff]
        %v646 = vld [vmem:[%s3 + $0x68] sm:$0xff]
        %v647 = vld [vmem:[%s3 + $0x70] sm:$0xff]
        %v648 = vld [vmem:[%s3 + $0x78] sm:$0xff]
        %v649 = vld [vmem:[%s3 + $0x80] sm:$0xff]
        %v650 = vld [vmem:[%s3 + $0x88] sm:$0xff]
        %v651 = vld [vmem:[%s3 + $0x90] sm:$0xff]
        %v652 = vld [vmem:[%s3 + $0x98] sm:$0xff]
        %v653 = vld [vmem:[%s3 + $0xa0] sm:$0xff]
        %v654 = vld [vmem:[%s3 + $0xa8] sm:$0xff]
        %v655 = vld [vmem:[%s3 + $0xb0] sm:$0xff]
        %v656 = vld [vmem:[%s3 + $0xb8] sm:$0xff]
        %v657 = vld [vmem:[%s3 + $0xc0] sm:$0xff]
        %v658 = vld [vmem:[%s3 + $0xc8] sm:$0xff]
        %v659 = vld [vmem:[%s3 + $0xd0] sm:$0xff]
        %v660 = vld [vmem:[%s3 + $0xd8] sm:$0xff]
        %v661 = vld [vmem:[%s3 + $0xe0] sm:$0xff]
        %v662 = vld [vmem:[%s3 + $0xe8] sm:$0xff]
        %v663 = vld [vmem:[%s3 + $0xf0] sm:$0xff]
        %v664 = vld [vmem:[%s3 + $0xf8] sm:$0xff]
        %v665 = vld [vmem:[%s4] sm:$0x3]
        %v667 = vlaneseq
        %v668 = vshrl.u32 %v667, 7
        %v669 = vsub.s32 0, %v668
        %v670 = vrot.slane %v665, %v669
        %v671 = vlaneseq
        %v672 = vshrl.u32 %v671, 7
        %v673 = vsub.s32 1, %v672
        %v674 = vrot.slane %v665, %v673
        %v709 = vunpack.c.l.b16 %v633
        %v710 = vunpack.c.h.b16 %v633
        %v711 = vunpack.c.l.b16 %v634
        %v712 = vunpack.c.h.b16 %v634
        %v713 = vunpack.c.l.b16 %v635
        %v714 = vunpack.c.h.b16 %v635
        %v715 = vunpack.c.l.b16 %v636
        %v716 = vunpack.c.h.b16 %v636
        %v717 = vunpack.c.l.b16 %v637
        %v718 = vunpack.c.h.b16 %v637
        %v719 = vunpack.c.l.b16 %v638
        %v720 = vunpack.c.h.b16 %v638
        %v721 = vunpack.c.l.b16 %v639
        %v722 = vunpack.c.h.b16 %v639
        %v723 = vunpack.c.l.b16 %v640
        %v724 = vunpack.c.h.b16 %v640
        %v725 = vunpack.c.l.b16 %v641
        %v726 = vunpack.c.h.b16 %v641
        %v727 = vunpack.c.l.b16 %v642
        %v728 = vunpack.c.h.b16 %v642
        %v729 = vunpack.c.l.b16 %v643
        %v730 = vunpack.c.h.b16 %v643
        %v731 = vunpack.c.l.b16 %v644
        %v732 = vunpack.c.h.b16 %v644
        %v733 = vunpack.c.l.b16 %v645
        %v734 = vunpack.c.h.b16 %v645
        %v735 = vunpack.c.l.b16 %v646
        %v736 = vunpack.c.h.b16 %v646
        %v737 = vunpack.c.l.b16 %v647
        %v738 = vunpack.c.h.b16 %v647
        %v739 = vunpack.c.l.b16 %v648
        %v740 = vunpack.c.h.b16 %v648
        %v741 = vunpack.c.l.b16 %v649
        %v742 = vunpack.c.h.b16 %v649
        %v743 = vunpack.c.l.b16 %v650
        %v744 = vunpack.c.h.b16 %v650
        %v745 = vunpack.c.l.b16 %v651
        %v746 = vunpack.c.h.b16 %v651
        %v747 = vunpack.c.l.b16 %v652
        %v748 = vunpack.c.h.b16 %v652
        %v749 = vunpack.c.l.b16 %v653
        %v750 = vunpack.c.h.b16 %v653
        %v751 = vunpack.c.l.b16 %v654
        %v752 = vunpack.c.h.b16 %v654
        %v753 = vunpack.c.l.b16 %v655
        %v754 = vunpack.c.h.b16 %v655
        %v755 = vunpack.c.l.b16 %v656
        %v756 = vunpack.c.h.b16 %v656
        %v757 = vunpack.c.l.b16 %v657
        %v758 = vunpack.c.h.b16 %v657
        %v759 = vunpack.c.l.b16 %v658
        %v760 = vunpack.c.h.b16 %v658
        %v761 = vunpack.c.l.b16 %v659
        %v762 = vunpack.c.h.b16 %v659
        %v763 = vunpack.c.l.b16 %v660
        %v764 = vunpack.c.h.b16 %v660
        %v765 = vunpack.c.l.b16 %v661
        %v766 = vunpack.c.h.b16 %v661
        %v767 = vunpack.c.l.b16 %v662
        %v768 = vunpack.c.h.b16 %v662
        %v769 = vunpack.c.l.b16 %v663
        %v770 = vunpack.c.h.b16 %v663
        %v771 = vunpack.c.l.b16 %v664
        %v772 = vunpack.c.h.b16 %v664
        %v773 = vpack.c.b16 %v711, %v709
        %v774 = vpack.c.b16 %v712, %v710
        %v775 = vpack.c.b16 %v715, %v713
        %v776 = vpack.c.b16 %v716, %v714
        %v777 = vpack.c.b16 %v719, %v717
        %v778 = vpack.c.b16 %v720, %v718
        %v779 = vpack.c.b16 %v723, %v721
        %v780 = vpack.c.b16 %v724, %v722
        %v781 = vpack.c.b16 %v727, %v725
        %v782 = vpack.c.b16 %v728, %v726
        %v783 = vpack.c.b16 %v731, %v729
        %v784 = vpack.c.b16 %v732, %v730
        %v785 = vpack.c.b16 %v735, %v733
        %v786 = vpack.c.b16 %v736, %v734
        %v787 = vpack.c.b16 %v739, %v737
        %v788 = vpack.c.b16 %v740, %v738
        %v789 = vpack.c.b16 %v743, %v741
        %v790 = vpack.c.b16 %v744, %v742
        %v791 = vpack.c.b16 %v747, %v745
        %v792 = vpack.c.b16 %v748, %v746
        %v793 = vpack.c.b16 %v751, %v749
        %v794 = vpack.c.b16 %v752, %v750
        %v795 = vpack.c.b16 %v755, %v753
        %v796 = vpack.c.b16 %v756, %v754
        %v797 = vpack.c.b16 %v759, %v757
        %v798 = vpack.c.b16 %v760, %v758
        %v799 = vpack.c.b16 %v763, %v761
        %v800 = vpack.c.b16 %v764, %v762
        %v801 = vpack.c.b16 %v767, %v765
        %v802 = vpack.c.b16 %v768, %v766
        %v803 = vpack.c.b16 %v771, %v769
        %v804 = vpack.c.b16 %v772, %v770
        %837 = vmatprep.subr.bf16.mxu0 %v774
        %838 = vmatpush1.bf16.msra.mxu0 %v773
        %839 = vmatprep.subr.bf16.mxu0 %v776
        %840 = vmatpush1.bf16.msra.mxu0 %v775
        %841 = vmatprep.subr.bf16.mxu0 %v778
        %842 = vmatpush1.bf16.msra.mxu0 %v777
        %843 = vmatprep.subr.bf16.mxu0 %v780
        %844 = vmatpush1.bf16.msra.mxu0 %v779
        %845 = vmatprep.subr.bf16.mxu0 %v782
        %846 = vmatpush1.bf16.msra.mxu0 %v781
        %847 = vmatprep.subr.bf16.mxu0 %v784
        %848 = vmatpush1.bf16.msra.mxu0 %v783
        %849 = vmatprep.subr.bf16.mxu0 %v786
        %850 = vmatpush1.bf16.msra.mxu0 %v785
        %851 = vmatprep.subr.bf16.mxu0 %v788
        %852 = vmatpush1.bf16.msra.mxu0 %v787
        %853 = vmatprep.subr.bf16.mxu0 %v790
        %854 = vmatpush1.bf16.msra.mxu0 %v789
        %855 = vmatprep.subr.bf16.mxu0 %v792
        %856 = vmatpush1.bf16.msra.mxu0 %v791
        %857 = vmatprep.subr.bf16.mxu0 %v794
        %858 = vmatpush1.bf16.msra.mxu0 %v793
        %859 = vmatprep.subr.bf16.mxu0 %v796
        %860 = vmatpush1.bf16.msra.mxu0 %v795
        %861 = vmatprep.subr.bf16.mxu0 %v798
        %862 = vmatpush1.bf16.msra.mxu0 %v797
        %863 = vmatprep.subr.bf16.mxu0 %v800
        %864 = vmatpush1.bf16.msra.mxu0 %v799
        %865 = vmatprep.subr.bf16.mxu0 %v802
        %866 = vmatpush1.bf16.msra.mxu0 %v801
        %867 = vmatprep.subr.bf16.mxu0 %v804
        %868 = vmatpush1.bf16.msra.mxu0 %v803
        %869 = vmatprep.mubr.bf16.mxu0 %v626
        %870 = vmatmul.mubr.bf16.gmra.mrb[0].mxu0 %v625
        %v871 = vpop.f32.mrb[0].mxu0
        %v872 = vadd.f32 %v670, %v871
        %v873 = vpop.f32.mrb[0].mxu0
        %v874 = vadd.f32 %v674, %v873
        %v875 = vpop.f32.mrb[0].mxu0
        %v876 = vadd.f32 %v670, %v875
        %v877 = vpop.f32.mrb[0].mxu0
        %v878 = vadd.f32 %v674, %v877
        %879 = vmatprep.mubr.bf16.mxu0 %v628
        %880 = vmatmul.mubr.bf16.gmra.mrb[0].mxu0 %v627
        %v881 = vpop.f32.mrb[0].mxu0
        %v882 = vadd.f32 %v670, %v881
        %v883 = vpop.f32.mrb[0].mxu0
        %v884 = vadd.f32 %v674, %v883
        %v885 = vpop.f32.mrb[0].mxu0
        %v886 = vadd.f32 %v670, %v885
        %v887 = vpop.f32.mrb[0].mxu0
        %v888 = vadd.f32 %v674, %v887
        %889 = vmatprep.mubr.bf16.mxu0 %v630
        %890 = vmatmul.mubr.bf16.gmra.mrb[0].mxu0 %v629
        %v891 = vpop.f32.mrb[0].mxu0
        %v892 = vadd.f32 %v670, %v891
        %v893 = vpop.f32.mrb[0].mxu0
        %v894 = vadd.f32 %v674, %v893
        %v895 = vpop.f32.mrb[0].mxu0
        %v896 = vadd.f32 %v670, %v895
        %v897 = vpop.f32.mrb[0].mxu0
        %v898 = vadd.f32 %v674, %v897
        %899 = vmatprep.mubr.bf16.mxu0 %v632
        %900 = vmatmul.mubr.bf16.gmra.mrb[0].mxu0 %v631
        %v901 = vpop.f32.mrb[0].mxu0
        %v902 = vadd.f32 %v670, %v901
        %v903 = vpop.f32.mrb[0].mxu0
        %v904 = vadd.f32 %v674, %v903
        %v905 = vpop.f32.mrb[0].mxu0
        %v906 = vadd.f32 %v670, %v905
        %v907 = vpop.f32.mrb[0].mxu0
        %v908 = vadd.f32 %v674, %v907
        %909 = vdwg.mxu0
        %v910 = vmax.f32 %v872, 0.0
        %v911 = vmax.f32 %v874, 0.0
        %v912 = vmax.f32 %v876, 0.0
        %v913 = vmax.f32 %v878, 0.0
        %v914 = vmax.f32 %v882, 0.0
        %v915 = vmax.f32 %v884, 0.0
        %v916 = vmax.f32 %v886, 0.0
        %v917 = vmax.f32 %v888, 0.0
        %v918 = vmax.f32 %v892, 0.0
        %v919 = vmax.f32 %v894, 0.0
        %v920 = vmax.f32 %v896, 0.0
        %v921 = vmax.f32 %v898, 0.0
        %v922 = vmax.f32 %v902, 0.0
        %v923 = vmax.f32 %v904, 0.0
        %v924 = vmax.f32 %v906, 0.0
        %v925 = vmax.f32 %v908, 0.0
        %v926 = vpack.c.bf16 %v912, %v910
        %v927 = vpack.c.bf16 %v913, %v911
        %v928 = vpack.c.bf16 %v916, %v914
        %v929 = vpack.c.bf16 %v917, %v915
        %v930 = vpack.c.bf16 %v920, %v918
        %v931 = vpack.c.bf16 %v921, %v919
        %v932 = vpack.c.bf16 %v924, %v922
        %v933 = vpack.c.bf16 %v925, %v923
        %v934 = vld [vmem:[%s5] sm:$0xf]
        %v935 = vld [vmem:[%s5 + $0x4] sm:$0xf]
        %v936 = vld [vmem:[%s5 + $0x8] sm:$0xf]
        %v937 = vld [vmem:[%s5 + $0xc] sm:$0xf]
        %v938 = vld [vmem:[%s5 + $0x10] sm:$0xf]
        %v939 = vld [vmem:[%s5 + $0x14] sm:$0xf]
        %v940 = vld [vmem:[%s5 + $0x18] sm:$0xf]
        %v941 = vld [vmem:[%s5 + $0x1c] sm:$0xf]
        %v942 = vld [vmem:[%s5 + $0x20] sm:$0xf]
        %v943 = vld [vmem:[%s5 + $0x24] sm:$0xf]
        %v944 = vld [vmem:[%s5 + $0x28] sm:$0xf]
        %v945 = vld [vmem:[%s5 + $0x2c] sm:$0xf]
        %v946 = vld [vmem:[%s5 + $0x30] sm:$0xf]
        %v947 = vld [vmem:[%s5 + $0x34] sm:$0xf]
        %v948 = vld [vmem:[%s5 + $0x38] sm:$0xf]
        %v949 = vld [vmem:[%s5 + $0x3c] sm:$0xf]
        %v950 = vld [vmem:[%s5 + $0x40] sm:$0xf]
        %v951 = vld [vmem:[%s5 + $0x44] sm:$0xf]
        %v952 = vld [vmem:[%s5 + $0x48] sm:$0xf]
        %v953 = vld [vmem:[%s5 + $0x4c] sm:$0xf]
        %v954 = vld [vmem:[%s5 + $0x50] sm:$0xf]
        %v955 = vld [vmem:[%s5 + $0x54] sm:$0xf]
        %v956 = vld [vmem:[%s5 + $0x58] sm:$0xf]
        %v957 = vld [vmem:[%s5 + $0x5c] sm:$0xf]
        %v958 = vld [vmem:[%s5 + $0x60] sm:$0xf]
        %v959 = vld [vmem:[%s5 + $0x64] sm:$0xf]
        %v960 = vld [vmem:[%s5 + $0x68] sm:$0xf]
        %v961 = vld [vmem:[%s5 + $0x6c] sm:$0xf]
        %v962 = vld [vmem:[%s5 + $0x70] sm:$0xf]
        %v963 = vld [vmem:[%s5 + $0x74] sm:$0xf]
        %v964 = vld [vmem:[%s5 + $0x78] sm:$0xf]
        %v965 = vld [vmem:[%s5 + $0x7c] sm:$0xf]
        %v966 = vld [vmem:[%s6] sm:$0x1]
        %v968 = vlaneseq
        %v969 = vshrl.u32 %v968, 7
        %v970 = vsub.s32 0, %v969
        %v971 = vrot.slane %v966, %v970
        %v1005 = vunpack.c.l.b16 %v934
        %v1006 = vunpack.c.l.b16 %v935
        %v1007 = vunpack.c.l.b16 %v936
        %v1008 = vunpack.c.l.b16 %v937
        %v1009 = vunpack.c.l.b16 %v938
        %v1010 = vunpack.c.l.b16 %v939
        %v1011 = vunpack.c.l.b16 %v940
        %v1012 = vunpack.c.l.b16 %v941
        %v1013 = vunpack.c.l.b16 %v942
        %v1014 = vunpack.c.l.b16 %v943
        %v1015 = vunpack.c.l.b16 %v944
        %v1016 = vunpack.c.l.b16 %v945
        %v1017 = vunpack.c.l.b16 %v946
        %v1018 = vunpack.c.l.b16 %v947
        %v1019 = vunpack.c.l.b16 %v948
        %v1020 = vunpack.c.l.b16 %v949
        %v1021 = vunpack.c.l.b16 %v950
        %v1022 = vunpack.c.l.b16 %v951
        %v1023 = vunpack.c.l.b16 %v952
        %v1024 = vunpack.c.l.b16 %v953
        %v1025 = vunpack.c.l.b16 %v954
        %v1026 = vunpack.c.l.b16 %v955
        %v1027 = vunpack.c.l.b16 %v956
        %v1028 = vunpack.c.l.b16 %v957
        %v1029 = vunpack.c.l.b16 %v958
        %v1030 = vunpack.c.l.b16 %v959
        %v1031 = vunpack.c.l.b16 %v960
        %v1032 = vunpack.c.l.b16 %v961
        %v1033 = vunpack.c.l.b16 %v962
        %v1034 = vunpack.c.l.b16 %v963
        %v1035 = vunpack.c.l.b16 %v964
        %v1036 = vunpack.c.l.b16 %v965
        %v1037 = vpack.c.b16 %v1006, %v1005
        %v1038 = vpack.c.b16 %v1008, %v1007
        %v1039 = vpack.c.b16 %v1010, %v1009
        %v1040 = vpack.c.b16 %v1012, %v1011
        %v1041 = vpack.c.b16 %v1014, %v1013
        %v1042 = vpack.c.b16 %v1016, %v1015
        %v1043 = vpack.c.b16 %v1018, %v1017
        %v1044 = vpack.c.b16 %v1020, %v1019
        %v1045 = vpack.c.b16 %v1022, %v1021
        %v1046 = vpack.c.b16 %v1024, %v1023
        %v1047 = vpack.c.b16 %v1026, %v1025
        %v1048 = vpack.c.b16 %v1028, %v1027
        %v1049 = vpack.c.b16 %v1030, %v1029
        %v1050 = vpack.c.b16 %v1032, %v1031
        %v1051 = vpack.c.b16 %v1034, %v1033
        %v1052 = vpack.c.b16 %v1036, %v1035
        %1069 = vmatprep.subr.bf16.mxu0 0
        %1070 = vmatpush1.bf16.msra.mxu0 %v1037
        %1071 = vmatprep.subr.bf16.mxu0 0
        %1072 = vmatpush1.bf16.msra.mxu0 %v1038
        %1073 = vmatprep.subr.bf16.mxu0 0
        %1074 = vmatpush1.bf16.msra.mxu0 %v1039
        %1075 = vmatprep.subr.bf16.mxu0 0
        %1076 = vmatpush1.bf16.msra.mxu0 %v1040
        %1077 = vmatprep.subr.bf16.mxu0 0
        %1078 = vmatpush1.bf16.msra.mxu0 %v1041
        %1079 = vmatprep.subr.bf16.mxu0 0
        %1080 = vmatpush1.bf16.msra.mxu0 %v1042
        %1081 = vmatprep.subr.bf16.mxu0 0
        %1082 = vmatpush1.bf16.msra.mxu0 %v1043
        %1083 = vmatprep.subr.bf16.mxu0 0
        %1084 = vmatpush1.bf16.msra.mxu0 %v1044
        %1085 = vmatprep.subr.bf16.mxu0 0
        %1086 = vmatpush1.bf16.msra.mxu0 %v1045
        %1087 = vmatprep.subr.bf16.mxu0 0
        %1088 = vmatpush1.bf16.msra.mxu0 %v1046
        %1089 = vmatprep.subr.bf16.mxu0 0
        %1090 = vmatpush1.bf16.msra.mxu0 %v1047
        %1091 = vmatprep.subr.bf16.mxu0 0
        %1092 = vmatpush1.bf16.msra.mxu0 %v1048
        %1093 = vmatprep.subr.bf16.mxu0 0
        %1094 = vmatpush1.bf16.msra.mxu0 %v1049
        %1095 = vmatprep.subr.bf16.mxu0 0
        %1096 = vmatpush1.bf16.msra.mxu0 %v1050
        %1097 = vmatprep.subr.bf16.mxu0 0
        %1098 = vmatpush1.bf16.msra.mxu0 %v1051
        %1099 = vmatprep.subr.bf16.mxu0 0
        %1100 = vmatpush1.bf16.msra.mxu0 %v1052
        %1101 = vmatprep.mubr.bf16.mxu0 %v927
        %1102 = vmatmul.mubr.bf16.gmra.mrb[0].mxu0 %v926
        %v1103 = vpop.f32.mrb[0].mxu0
        %v1104 = vadd.f32 %v971, %v1103
        %v1105 = vpop.f32.mrb[0].mxu0
        %v1106 = vpop.f32.mrb[0].mxu0
        %v1107 = vadd.f32 %v971, %v1106
        %v1108 = vpop.f32.mrb[0].mxu0
        %1109 = vmatprep.mubr.bf16.mxu0 %v929
        %1110 = vmatmul.mubr.bf16.gmra.mrb[0].mxu0 %v928
        %v1111 = vpop.f32.mrb[0].mxu0
        %v1112 = vadd.f32 %v971, %v1111
        %v1113 = vpop.f32.mrb[0].mxu0
        %v1114 = vpop.f32.mrb[0].mxu0
        %v1115 = vadd.f32 %v971, %v1114
        %v1116 = vpop.f32.mrb[0].mxu0
        %1117 = vmatprep.mubr.bf16.mxu0 %v931
        %1118 = vmatmul.mubr.bf16.gmra.mrb[0].mxu0 %v930
        %v1119 = vpop.f32.mrb[0].mxu0
        %v1120 = vadd.f32 %v971, %v1119
        %v1121 = vpop.f32.mrb[0].mxu0
        %v1122 = vpop.f32.mrb[0].mxu0
        %v1123 = vadd.f32 %v971, %v1122
        %v1124 = vpop.f32.mrb[0].mxu0
        %1125 = vmatprep.mubr.bf16.mxu0 %v933
        %1126 = vmatmul.mubr.bf16.gmra.mrb[0].mxu0 %v932
        %v1127 = vpop.f32.mrb[0].mxu0
        %v1128 = vadd.f32 %v971, %v1127
        %v1129 = vpop.f32.mrb[0].mxu0
        %v1130 = vpop.f32.mrb[0].mxu0
        %v1131 = vadd.f32 %v971, %v1130
        %v1132 = vpop.f32.mrb[0].mxu0
        %1133 = vdwg.mxu0
        %1134 = vst [vmem:[%s274] sm:$0xff] %v1104
        %1135 = vst [vmem:[%s274 + $0x8] sm:$0xff] %v1107
        %1136 = vst [vmem:[%s274 + $0x10] sm:$0xff] %v1112
        %1137 = vst [vmem:[%s274 + $0x18] sm:$0xff] %v1115
        %1138 = vst [vmem:[%s274 + $0x20] sm:$0xff] %v1120
        %1139 = vst [vmem:[%s274 + $0x28] sm:$0xff] %v1123
        %1140 = vst [vmem:[%s274 + $0x30] sm:$0xff] %v1128
        %1141 = vst [vmem:[%s274 + $0x38] sm:$0xff] %v1131
        %s1142 = sand.u32 %s181, 1
        %s1143 = scalar_lea.sflag [#allocation3], %s1142
        %s1144 = sand.u32 %s181, 1
        %s1145 = smul.addr %s1144, 64
        %s1146 = scalar_lea.vmem [#allocation2], %s1145
        // Predicated region
        $region49: #{model_forward.1} parent=47 // pred_check
          %p1147 = pneg %p191
        $region50: #{model_forward.1} parent=47 // pred_check_branch
          %1149 = sbr.rel (%p1147) target = $region52
        $region51: #{model_forward.1} parent=47 // pred_region
          %s1150 = smul.u32 8, %s21
          %s1152 = ssub.s32 1024, 1024
          %1153 = vsyncadd %s1143, %s1152
          %s1154 = smul.addr %s1150, 128
          %s1155 = scalar_lea.hbm %s7, %s1154
          %s1156 = sshll.u32 %s1146, 4
          %s1157 = int_to_ptr.vmem [resolvable:$true] %s1156
          %1162 = dma.vmem_to_hbm [thread:$0]  %s1157, 1024, %s1155, %s1143, 128, 128, 8
        $region52: #{model_forward.1} parent=47 // pred_fallthru
          _
      $region48: #{model_forward.1} parent=5 // pred_fallthru
        _
      %p1163 = scmp.le.s32.totalorder 2, %s16
      // Predicated region
      $region53: #{model_forward.1} parent=5 // pred_check
        %p1164 = pneg %p1163
      $region54: #{model_forward.1} parent=5 // pred_check_branch
        %1166 = sbr.rel (%p1164) target = $region56
      $region55: #{model_forward.1} parent=5 // pred_region
        %s1167 = ssub.s32 %s16, 2
        // Predicated region
        $region57: #{model_forward.1} parent=55 // pred_check
          %p1168 = pneg %p197
        $region58: #{model_forward.1} parent=55 // pred_check_branch
          %1170 = sbr.rel (%p1168) target = $region60
        $region59: #{model_forward.1} parent=55 // pred_region
          %s1171 = sand.u32 %s182, 1
          %s1172 = scalar_lea.sflag [#allocation3], %s1171
          %s1173 = sand.u32 %s182, 1
          %s1174 = smul.addr %s1173, 64
          %s1175 = scalar_lea.vmem [#allocation2], %s1174
          %1176 = dma.done %s1172, 1024
        $region60: #{model_forward.1} parent=55 // pred_fallthru
          _
      $region56: #{model_forward.1} parent=5 // pred_fallthru
        _
    $region6: #{model_forward.1} parent=1 // loop_footer
      %s20 = sadd.s32 1, %s16
    $region7: #{model_forward.1} parent=1 // loop_footer_branch
      %15 = sbr.rel target = $region3
    $region8: #{model_forward.1} parent=1 // loop_exit
      _
    %1177 = vsyncpa [#allocation3], 1
    %s1178 = scalar_lea.sflag [#allocation3], 1
    %1179 = vsyncpa %s1178, 1

</llo_original>
